<compile_context>
chip_gen: v6e
topology: v6e:2x2x1
jax: 0.10.0
libtpu: 0.0.40
codegen_flags: <defaults>
</compile_context>

<pallas_src>
import functools

import jax
import jax.numpy as jnp
from jax.experimental import pallas as pl
from jax.experimental.pallas import tpu as pltpu

LANES = 128
SUBLANES = 8
MAX_TILE_ROWS = 8192      # 8192 * 128 * 4 B = 4 MiB per f32 input tile
CHUNK_ROWS = 2048         # in-kernel processing chunk (bounds temp live ranges)


def _r2_kernel(c_ref, yt_ref, yp_ref, out_ref, *,
               total_rows, tile_rows, chunk_rows, acc_rows):
    s = pl.program_id(0)

    @pl.when(s == 0)
    def _():
        out_ref[...] = jnp.zeros_like(out_ref)

    c = c_ref[0]                                  # f32 shift scalar (SMEM)
    groups = chunk_rows // acc_rows

    def accumulate(yt, yp, mask=None):
        # yt / yp: (chunk_rows, LANES) float32
        d = yt - yp
        ytc = yt - c
        if mask is not None:                      # tail chunk only (rare path)
            d = jnp.where(mask, d, 0.0)
            ytc = jnp.where(mask, ytc, 0.0)
        # Leading-axis reduction -> pure vreg-wise VALU adds into acc_rows/8
        # independent (8,128) accumulator vregs per statistic (no XLU).
        out_ref[0] += jnp.sum((d * d).reshape(groups, acc_rows, LANES), axis=0)
        out_ref[1] += jnp.sum(ytc.reshape(groups, acc_rows, LANES), axis=0)
        out_ref[2] += jnp.sum((ytc * ytc).reshape(groups, acc_rows, LANES), axis=0)

    row0 = s * tile_rows
    n_chunks = tile_rows // chunk_rows

    @pl.loop(0, n_chunks)
    def _(chunk):
        off = pl.multiple_of(chunk * chunk_rows, chunk_rows)
        valid = total_rows - row0 - off           # rows of real data remaining

        @pl.when(valid >= chunk_rows)             # hot path: no masking at all
        def _():
            accumulate(yt_ref[pl.ds(off, chunk_rows), :].astype(jnp.float32),
                       yp_ref[pl.ds(off, chunk_rows), :].astype(jnp.float32))

        @pl.when(jnp.logical_and(valid > 0, valid < chunk_rows))
        def _():                                  # executes at most once/call
            rid = jax.lax.broadcasted_iota(jnp.int32, (chunk_rows, LANES), 0)
            accumulate(yt_ref[pl.ds(off, chunk_rows), :].astype(jnp.float32),
                       yp_ref[pl.ds(off, chunk_rows), :].astype(jnp.float32),
                       mask=rid < valid)


def r2_loss(y_true: jax.Array, y_pred: jax.Array, epsilon: float = 1e-6) -> jax.Array:
    assert y_true.shape == y_pred.shape, "y_true and y_pred must have same shape"
    n = int(y_true.size)
    assert n > 0

    out_dtype = jnp.result_type(y_true.dtype, y_pred.dtype)
    if not jnp.issubdtype(out_dtype, jnp.floating):
        out_dtype = jnp.float32

    yt = y_true.reshape(-1)
    yp = y_pred.reshape(-1)

    # Shift constant for the numerically-stable single-pass ss_tot.
    c_arr = yt[:1].astype(jnp.float32)

    itemsize = jnp.dtype(yt.dtype).itemsize
    sub_mult = {4: SUBLANES, 2: 2 * SUBLANES, 1: 4 * SUBLANES}.get(itemsize, SUBLANES)
    pad_unit = sub_mult * LANES

    padded = pl.cdiv(n, pad_unit) * pad_unit
    if padded != n:
        # Zero-pad only when numel is not already lane/sublane aligned; the
        # pads' (0 - c) contributions are removed in the epilogue.
        yt = jnp.pad(yt, (0, padded - n))
        yp = jnp.pad(yp, (0, padded - n))

    rows = padded // LANES                        # multiple of sub_mult
    yt2d = yt.reshape(rows, LANES)
    yp2d = yp.reshape(rows, LANES)

    if rows > MAX_TILE_ROWS:
        tile_rows = MAX_TILE_ROWS
        chunk_rows = CHUNK_ROWS
    else:
        tile_rows = rows
        chunk_rows = CHUNK_ROWS if rows % CHUNK_ROWS == 0 else rows
    steps = pl.cdiv(rows, tile_rows)

    acc_rows = next(a for a in (64, 32, 16, 8) if chunk_rows % a == 0)

    kernel = functools.partial(
        _r2_kernel, total_rows=int(rows), tile_rows=int(tile_rows),
        chunk_rows=int(chunk_rows), acc_rows=int(acc_rows))

    tile_bytes = tile_rows * LANES * itemsize
    vmem_limit = int(min(56 * 1024 * 1024,
                         max(32 * 1024 * 1024, 6 * tile_bytes + 16 * 1024 * 1024)))

    cost = pl.CostEstimate(
        flops=7 * padded,
        transcendentals=0,
        bytes_accessed=2 * padded * itemsize + 3 * acc_rows * LANES * 4)

    parts = pl.pallas_call(
        kernel,
        out_shape=jax.ShapeDtypeStruct((3, acc_rows, LANES), jnp.float32),
        grid_spec=pltpu.PrefetchScalarGridSpec(
            num_scalar_prefetch=0,
            grid=(steps,),
            in_specs=[
                pl.BlockSpec(memory_space=pltpu.MemorySpace.SMEM),   # c (1,)
                pl.BlockSpec((tile_rows, LANES), lambda s: (s, 0)),  # y_true
                pl.BlockSpec((tile_rows, LANES), lambda s: (s, 0)),  # y_pred
            ],
            out_specs=pl.BlockSpec((3, acc_rows, LANES), lambda s: (0, 0, 0)),
        ),
        compiler_params=pltpu.CompilerParams(
            dimension_semantics=("arbitrary",),
            vmem_limit_bytes=vmem_limit,
        ),
        cost_estimate=cost,
    )(c_arr, yt2d, yp2d)

    # Tiny epilogue: one cross-lane/cross-partial reduce + scalar math.
    sums = jnp.sum(parts, axis=(1, 2))            # (3,)
    ss_res, s1, s2 = sums[0], sums[1], sums[2]
    c = c_arr[0]
    if padded != n:                               # undo the zero-pad's (0-c) terms
        pad_cnt = jnp.float32(padded - n)
        s1 = s1 + pad_cnt * c
        s2 = s2 - pad_cnt * c * c
    ss_tot = s2 - (s1 * s1) / jnp.float32(n)      # == sum((y - mean(y))^2)
    out = ss_res / (ss_tot + jnp.float32(epsilon))
    return out.astype(out_dtype)


def r2_loss_ref(y_true, y_pred, epsilon=1e-6):
    ss_res = jnp.sum((y_true - y_pred) ** 2)
    ss_tot = jnp.sum((y_true - jnp.mean(y_true)) ** 2)
    return ss_res / (ss_tot + epsilon)


if __name__ == "__main__":
    key = jax.random.PRNGKey(0)

    # Primary small case: NCHW-like shape, as the loss is used in figconvnet.
    k1, k2 = jax.random.split(key)
    y_true = jax.random.normal(k1, (2, 4, 16, 16), dtype=jnp.float32)
    y_pred = y_true + 0.1 * jax.random.normal(k2, (2, 4, 16, 16), dtype=jnp.float32)
    out = jax.block_until_ready(r2_loss(y_true, y_pred))
    ref = r2_loss_ref(y_true, y_pred)
    assert jnp.allclose(out, ref, rtol=1e-5, atol=1e-6), (out, ref)

    # Secondary case: odd size, exercises multi-step grid + tail-mask + pad paths.
    k3, k4 = jax.random.split(k2)
    yt2 = jax.random.normal(k3, (1153, 997), dtype=jnp.float32)
    yp2 = yt2 + 0.1 * jax.random.normal(k4, (1153, 997), dtype=jnp.float32)
    out2 = jax.block_until_ready(r2_loss(yt2, yp2))
    ref2 = r2_loss_ref(yt2, yp2)
    assert jnp.allclose(out2, ref2, rtol=5e-4, atol=1e-6), (out2, ref2)

    print("KERNEL_OK")
</pallas_src>

<mosaic_0001>
module attributes {stable_mosaic.version = 11 : i64} {
  func.func @_r2_kernel(%arg0: i32, %arg1: memref<1xf32, #tpu.memory_space<smem>>, %arg2: memref<16x128xf32, #tpu.memory_space<vmem>>, %arg3: memref<16x128xf32, #tpu.memory_space<vmem>>, %arg4: memref<3x16x128xf32, #tpu.memory_space<vmem>>) attributes {dimension_semantics = [#tpu.dimension_semantics<arbitrary>], iteration_bounds = array<i64: 1>, scalar_prefetch = 0 : i64, scratch_operands = 0 : i64, tpu.core_type = #tpu.core_type<tc>, window_params = [{transform_indices = @transform_0, window_bounds = array<i64: 1>}, {transform_indices = @transform_1, window_bounds = array<i64: 16, 128>}, {transform_indices = @transform_2, window_bounds = array<i64: 16, 128>}, {pipeline_mode = #tpu.pipeline_mode<synchronous>, transform_indices = @transform_3, window_bounds = array<i64: 3, 16, 128>}]} {
    %c0_i32 = arith.constant 0 : i32
    %0 = arith.cmpi eq, %arg0, %c0_i32 : i32
    %1 = arith.extui %0 : i1 to i32
    %c0_i32_0 = arith.constant 0 : i32
    %2 = arith.cmpi ne, %1, %c0_i32_0 : i32
    scf.if %2 {
      %cst = arith.constant 0.000000e+00 : f32
      %19 = vector.broadcast %cst : f32 to vector<3x16x128xf32>
      %c0_11 = arith.constant 0 : index
      %c0_12 = arith.constant 0 : index
      %c0_13 = arith.constant 0 : index
      %20 = vector.load %arg4[%c0_11, %c0_12, %c0_13] : memref<3x16x128xf32, #tpu.memory_space<vmem>>, vector<3x16x128xf32>
      tpu.vector_store %arg4[%c0_11, %c0_12, %c0_13], %19 {strides = array<i32>} : memref<3x16x128xf32, #tpu.memory_space<vmem>>, vector<3x16x128xf32>,
    } else {
    }
    %c0 = arith.constant 0 : index
    %3 = memref.load %arg1[%c0] : memref<1xf32, #tpu.memory_space<smem>>
    %c16_i32 = arith.constant 16 : i32
    %4 = arith.muli %arg0, %c16_i32 : i32
    %c0_i32_1 = arith.constant 0 : i32
    %c1_i32 = arith.constant 1 : i32
    %5 = arith.muli %c0_i32_1, %c1_i32 : i32
    %c0_i32_2 = arith.constant 0 : i32
    %6 = arith.addi %c0_i32_2, %5 : i32
    %c16_i32_3 = arith.constant 16 : i32
    %7 = arith.muli %6, %c16_i32_3 : i32
    %8 = tpu.assume_multiple %7, 16 : i32
    %c16_i32_4 = arith.constant 16 : i32
    %9 = arith.subi %c16_i32_4, %4 : i32
    %10 = arith.subi %9, %8 : i32
    %c16_i32_5 = arith.constant 16 : i32
    %11 = arith.cmpi sge, %10, %c16_i32_5 : i32
    %12 = arith.extui %11 : i1 to i32
    %c0_i32_6 = arith.constant 0 : i32
    %13 = arith.cmpi ne, %12, %c0_i32_6 : i32
    scf.if %13 {
      %19 = arith.index_cast %8 : i32 to index
      %c0_11 = arith.constant 0 : index
      %20 = vector.load %arg2[%19, %c0_11] : memref<16x128xf32, #tpu.memory_space<vmem>>, vector<16x128xf32>
      %21 = arith.index_cast %8 : i32 to index
      %c0_12 = arith.constant 0 : index
      %22 = vector.load %arg3[%21, %c0_12] : memref<16x128xf32, #tpu.memory_space<vmem>>, vector<16x128xf32>
      %23 = arith.subf %20, %22 : vector<16x128xf32>
      %24 = vector.broadcast %3 : f32 to vector<16x128xf32>
      %25 = arith.subf %20, %24 : vector<16x128xf32>
      %c0_13 = arith.constant 0 : index
      %c0_14 = arith.constant 0 : index
      %c0_15 = arith.constant 0 : index
      %26 = vector.load %arg4[%c0_13, %c0_14, %c0_15] : memref<3x16x128xf32, #tpu.memory_space<vmem>>, vector<1x16x128xf32>
      %27 = vector.shape_cast %26 : vector<1x16x128xf32> to vector<16x128xf32>
      %28 = arith.mulf %23, %23 : vector<16x128xf32>
      %29 = vector.shape_cast %28 : vector<16x128xf32> to vector<1x16x128xf32>
      %cst = arith.constant dense<0.000000e+00> : vector<16x128xf32>
      %30 = vector.multi_reduction <add>, %29, %cst [0] : vector<1x16x128xf32> to vector<16x128xf32>
      %31 = arith.addf %27, %30 : vector<16x128xf32>
      %c0_16 = arith.constant 0 : index
      %c0_17 = arith.constant 0 : index
      %c0_18 = arith.constant 0 : index
      %32 = vector.load %arg4[%c0_16, %c0_17, %c0_18] : memref<3x16x128xf32, #tpu.memory_space<vmem>>, vector<1x16x128xf32>
      %33 = vector.shape_cast %32 : vector<1x16x128xf32> to vector<16x128xf32>
      %34 = vector.shape_cast %31 : vector<16x128xf32> to vector<1x16x128xf32>
      tpu.vector_store %arg4[%c0_16, %c0_17, %c0_18], %34 {strides = array<i32>} : memref<3x16x128xf32, #tpu.memory_space<vmem>>, vector<1x16x128xf32>,
      %c1 = arith.constant 1 : index
      %c0_19 = arith.constant 0 : index
      %c0_20 = arith.constant 0 : index
      %35 = vector.load %arg4[%c1, %c0_19, %c0_20] : memref<3x16x128xf32, #tpu.memory_space<vmem>>, vector<1x16x128xf32>
      %36 = vector.shape_cast %35 : vector<1x16x128xf32> to vector<16x128xf32>
      %37 = vector.shape_cast %25 : vector<16x128xf32> to vector<1x16x128xf32>
      %cst_21 = arith.constant dense<0.000000e+00> : vector<16x128xf32>
      %38 = vector.multi_reduction <add>, %37, %cst_21 [0] : vector<1x16x128xf32> to vector<16x128xf32>
      %39 = arith.addf %36, %38 : vector<16x128xf32>
      %c1_22 = arith.constant 1 : index
      %c0_23 = arith.constant 0 : index
      %c0_24 = arith.constant 0 : index
      %40 = vector.load %arg4[%c1_22, %c0_23, %c0_24] : memref<3x16x128xf32, #tpu.memory_space<vmem>>, vector<1x16x128xf32>
      %41 = vector.shape_cast %40 : vector<1x16x128xf32> to vector<16x128xf32>
      %42 = vector.shape_cast %39 : vector<16x128xf32> to vector<1x16x128xf32>
      tpu.vector_store %arg4[%c1_22, %c0_23, %c0_24], %42 {strides = array<i32>} : memref<3x16x128xf32, #tpu.memory_space<vmem>>, vector<1x16x128xf32>,
      %c2 = arith.constant 2 : index
      %c0_25 = arith.constant 0 : index
      %c0_26 = arith.constant 0 : index
      %43 = vector.load %arg4[%c2, %c0_25, %c0_26] : memref<3x16x128xf32, #tpu.memory_space<vmem>>, vector<1x16x128xf32>
      %44 = vector.shape_cast %43 : vector<1x16x128xf32> to vector<16x128xf32>
      %45 = arith.mulf %25, %25 : vector<16x128xf32>
      %46 = vector.shape_cast %45 : vector<16x128xf32> to vector<1x16x128xf32>
      %cst_27 = arith.constant dense<0.000000e+00> : vector<16x128xf32>
      %47 = vector.multi_reduction <add>, %46, %cst_27 [0] : vector<1x16x128xf32> to vector<16x128xf32>
      %48 = arith.addf %44, %47 : vector<16x128xf32>
      %c2_28 = arith.constant 2 : index
      %c0_29 = arith.constant 0 : index
      %c0_30 = arith.constant 0 : index
      %49 = vector.load %arg4[%c2_28, %c0_29, %c0_30] : memref<3x16x128xf32, #tpu.memory_space<vmem>>, vector<1x16x128xf32>
      %50 = vector.shape_cast %49 : vector<1x16x128xf32> to vector<16x128xf32>
      %51 = vector.shape_cast %48 : vector<16x128xf32> to vector<1x16x128xf32>
      tpu.vector_store %arg4[%c2_28, %c0_29, %c0_30], %51 {strides = array<i32>} : memref<3x16x128xf32, #tpu.memory_space<vmem>>, vector<1x16x128xf32>,
    } else {
    }
    %c0_i32_7 = arith.constant 0 : i32
    %14 = arith.cmpi sgt, %10, %c0_i32_7 : i32
    %c16_i32_8 = arith.constant 16 : i32
    %15 = arith.cmpi slt, %10, %c16_i32_8 : i32
    %16 = arith.andi %14, %15 : i1
    %17 = arith.extui %16 : i1 to i32
    %c0_i32_9 = arith.constant 0 : i32
    %18 = arith.cmpi ne, %17, %c0_i32_9 : i32
    scf.if %18 {
      %19 = tpu.iota {dimensions = array<i32: 0>} : vector<16x128xi32>
      %20 = arith.index_cast %8 : i32 to index
      %c0_11 = arith.constant 0 : index
      %21 = vector.load %arg2[%20, %c0_11] : memref<16x128xf32, #tpu.memory_space<vmem>>, vector<16x128xf32>
      %22 = arith.index_cast %8 : i32 to index
      %c0_12 = arith.constant 0 : index
      %23 = vector.load %arg3[%22, %c0_12] : memref<16x128xf32, #tpu.memory_space<vmem>>, vector<16x128xf32>
      %24 = vector.broadcast %10 : i32 to vector<16x128xi32>
      %25 = arith.cmpi slt, %19, %24 : vector<16x128xi32>
      %26 = arith.subf %21, %23 : vector<16x128xf32>
      %27 = vector.broadcast %3 : f32 to vector<16x128xf32>
      %28 = arith.subf %21, %27 : vector<16x128xf32>
      %cst = arith.constant 0.000000e+00 : f32
      %29 = vector.broadcast %cst : f32 to vector<16x128xf32>
      %30 = arith.select %25, %26, %29 : vector<16x128xi1>, vector<16x128xf32>
      %cst_13 = arith.constant 0.000000e+00 : f32
      %31 = vector.broadcast %cst_13 : f32 to vector<16x128xf32>
      %32 = arith.select %25, %28, %31 : vector<16x128xi1>, vector<16x128xf32>
      %c0_14 = arith.constant 0 : index
      %c0_15 = arith.constant 0 : index
      %c0_16 = arith.constant 0 : index
      %33 = vector.load %arg4[%c0_14, %c0_15, %c0_16] : memref<3x16x128xf32, #tpu.memory_space<vmem>>, vector<1x16x128xf32>
      %34 = vector.shape_cast %33 : vector<1x16x128xf32> to vector<16x128xf32>
      %35 = arith.mulf %30, %30 : vector<16x128xf32>
      %36 = vector.shape_cast %35 : vector<16x128xf32> to vector<1x16x128xf32>
      %cst_17 = arith.constant dense<0.000000e+00> : vector<16x128xf32>
      %37 = vector.multi_reduction <add>, %36, %cst_17 [0] : vector<1x16x128xf32> to vector<16x128xf32>
      %38 = arith.addf %34, %37 : vector<16x128xf32>
      %c0_18 = arith.constant 0 : index
      %c0_19 = arith.constant 0 : index
      %c0_20 = arith.constant 0 : index
      %39 = vector.load %arg4[%c0_18, %c0_19, %c0_20] : memref<3x16x128xf32, #tpu.memory_space<vmem>>, vector<1x16x128xf32>
      %40 = vector.shape_cast %39 : vector<1x16x128xf32> to vector<16x128xf32>
      %41 = vector.shape_cast %38 : vector<16x128xf32> to vector<1x16x128xf32>
      tpu.vector_store %arg4[%c0_18, %c0_19, %c0_20], %41 {strides = array<i32>} : memref<3x16x128xf32, #tpu.memory_space<vmem>>, vector<1x16x128xf32>,
      %c1 = arith.constant 1 : index
      %c0_21 = arith.constant 0 : index
      %c0_22 = arith.constant 0 : index
      %42 = vector.load %arg4[%c1, %c0_21, %c0_22] : memref<3x16x128xf32, #tpu.memory_space<vmem>>, vector<1x16x128xf32>
      %43 = vector.shape_cast %42 : vector<1x16x128xf32> to vector<16x128xf32>
      %44 = vector.shape_cast %32 : vector<16x128xf32> to vector<1x16x128xf32>
      %cst_23 = arith.constant dense<0.000000e+00> : vector<16x128xf32>
      %45 = vector.multi_reduction <add>, %44, %cst_23 [0] : vector<1x16x128xf32> to vector<16x128xf32>
      %46 = arith.addf %43, %45 : vector<16x128xf32>
      %c1_24 = arith.constant 1 : index
      %c0_25 = arith.constant 0 : index
      %c0_26 = arith.constant 0 : index
      %47 = vector.load %arg4[%c1_24, %c0_25, %c0_26] : memref<3x16x128xf32, #tpu.memory_space<vmem>>, vector<1x16x128xf32>
      %48 = vector.shape_cast %47 : vector<1x16x128xf32> to vector<16x128xf32>
      %49 = vector.shape_cast %46 : vector<16x128xf32> to vector<1x16x128xf32>
      tpu.vector_store %arg4[%c1_24, %c0_25, %c0_26], %49 {strides = array<i32>} : memref<3x16x128xf32, #tpu.memory_space<vmem>>, vector<1x16x128xf32>,
      %c2 = arith.constant 2 : index
      %c0_27 = arith.constant 0 : index
      %c0_28 = arith.constant 0 : index
      %50 = vector.load %arg4[%c2, %c0_27, %c0_28] : memref<3x16x128xf32, #tpu.memory_space<vmem>>, vector<1x16x128xf32>
      %51 = vector.shape_cast %50 : vector<1x16x128xf32> to vector<16x128xf32>
      %52 = arith.mulf %32, %32 : vector<16x128xf32>
      %53 = vector.shape_cast %52 : vector<16x128xf32> to vector<1x16x128xf32>
      %cst_29 = arith.constant dense<0.000000e+00> : vector<16x128xf32>
      %54 = vector.multi_reduction <add>, %53, %cst_29 [0] : vector<1x16x128xf32> to vector<16x128xf32>
      %55 = arith.addf %51, %54 : vector<16x128xf32>
      %c2_30 = arith.constant 2 : index
      %c0_31 = arith.constant 0 : index
      %c0_32 = arith.constant 0 : index
      %56 = vector.load %arg4[%c2_30, %c0_31, %c0_32] : memref<3x16x128xf32, #tpu.memory_space<vmem>>, vector<1x16x128xf32>
      %57 = vector.shape_cast %56 : vector<1x16x128xf32> to vector<16x128xf32>
      %58 = vector.shape_cast %55 : vector<16x128xf32> to vector<1x16x128xf32>
      tpu.vector_store %arg4[%c2_30, %c0_31, %c0_32], %58 {strides = array<i32>} : memref<3x16x128xf32, #tpu.memory_space<vmem>>, vector<1x16x128xf32>,
    } else {
    }
    %c1_i32_10 = arith.constant 1 : i32
    return
  }
  func.func @transform_0(%arg0: i32) -> i32 {
    %c0_i32 = arith.constant 0 : i32
    %c0_i32_0 = arith.constant 0 : i32
    return %c0_i32 : i32
  }
  func.func @transform_1(%arg0: i32) -> (i32, i32) {
    %c0_i32 = arith.constant 0 : i32
    %c0_i32_0 = arith.constant 0 : i32
    return %arg0, %c0_i32 : i32, i32
  }
  func.func @transform_2(%arg0: i32) -> (i32, i32) {
    %c0_i32 = arith.constant 0 : i32
    %c0_i32_0 = arith.constant 0 : i32
    return %arg0, %c0_i32 : i32, i32
  }
  func.func @transform_3(%arg0: i32) -> (i32, i32, i32) {
    %c0_i32 = arith.constant 0 : i32
    %c0_i32_0 = arith.constant 0 : i32
    %c0_i32_1 = arith.constant 0 : i32
    %c0_i32_2 = arith.constant 0 : i32
    return %c0_i32, %c0_i32_0, %c0_i32_1 : i32, i32, i32
  }
}

</mosaic_0001>

<llo_original>
// kernel: tpu_custom_call.1
$region0: #{tpu_custom_call.1}
  #allocation0 [shape = 'u32[]', space=smem, size = 0x4, offset = 0x4, fixed_abs, tag = 'smem constant byte address 0x4 - core index']
  #allocation1 [shape = 'u32[144,128]{1,0:T(1,128)}', space=vmem, size = 0x12000, scoped, tag = 'internal scratch']
  #allocation2 [shape = 'f32[1]{0:T(128)S(6)}', space=smem, size = 0x200, scoped, tag = 'scoped memory for tpu_custom_call.1']
  %s0 = inlined_call_operand.<no memory space> [shape: f32[1], index: 0, kind: input, shape index: {}]
  %s1 = inlined_call_operand.hbm [shape: f32[16,128], index: 1, kind: input, shape index: {}]
  %s2 = inlined_call_operand.hbm [shape: f32[16,128], index: 2, kind: input, shape index: {}]
  %s3 = inlined_call_operand.hbm [shape: f32[3,16,128], index: 3, kind: output, shape index: {}]
  %s4 = sld [smem:[#allocation0]]
  $region42: #{tpu_custom_call.1} parent=0
    _
  %s6 = ssub.s32 1, %s4
  %s7 = scalar_select 0, %s6, %s4
  %8 = sst [smem:[#allocation2]] %s0
  $region1: #{tpu_custom_call.1} parent=0
    #allocation3 [shape = 'u8[8192]{0}', space=vmem, size = 0x2000, scoped, tag = 'input window, operand 1, single buffered']
    #allocation4 [shape = 's32[1]{0}', space=sflag, size = 0x4, scoped, tag = 'scoped memory for tpu_custom_call.1']
    #allocation5 [shape = 's32[1]{0}', space=sflag, size = 0x4, scoped, tag = 'scoped memory for tpu_custom_call.1']
    #allocation6 [shape = 'u8[8192]{0}', space=vmem, size = 0x2000, scoped, tag = 'input window, operand 2, single buffered']
    #allocation7 [shape = 's32[1]{0}', space=sflag, size = 0x4, scoped, tag = 'scoped memory for tpu_custom_call.1']
    #allocation8 [shape = 'u8[24576]{0}', space=vmem, size = 0x6000, scoped, tag = 'output window, operand 0, single buffered']
    %9 = vsyncpa [#allocation4], 0
    %10 = vsyncpa [#allocation7], 0
    %11 = vsyncpa [#allocation5], 0
    // Predicated region
    $region2: #{tpu_custom_call.1} parent=1 // pred_check
      _
    $region3: #{tpu_custom_call.1} parent=1 // pred_check_branch
      %13 = sbr.rel (0) target = $region5
    $region4: #{tpu_custom_call.1} parent=1 // pred_region
      _
    $region5: #{tpu_custom_call.1} parent=1 // pred_fallthru
      _
    // Predicated region
    $region6: #{tpu_custom_call.1} parent=1 // pred_check
      _
    $region7: #{tpu_custom_call.1} parent=1 // pred_check_branch
      %15 = sbr.rel (0) target = $region9
    $region8: #{tpu_custom_call.1} parent=1 // pred_region
      %s17 = ssub.s32 256, 256
      %18 = vsyncadd [#allocation4], %s17
      %s19 = sshll.u32 [#allocation3], 4
      %s20 = int_to_ptr.vmem [resolvable:$true] %s19
      %25 = dma.hbm_to_vmem [thread:$0]  %s1, 256, %s20, [#allocation4], 128, 128, 8
    $region9: #{tpu_custom_call.1} parent=1 // pred_fallthru
      _
    // Predicated region
    $region10: #{tpu_custom_call.1} parent=1 // pred_check
      _
    $region11: #{tpu_custom_call.1} parent=1 // pred_check_branch
      %27 = sbr.rel (0) target = $region13
    $region12: #{tpu_custom_call.1} parent=1 // pred_region
      %s29 = ssub.s32 256, 256
      %30 = vsyncadd [#allocation7], %s29
      %s31 = sshll.u32 [#allocation6], 4
      %s32 = int_to_ptr.vmem [resolvable:$true] %s31
      %37 = dma.hbm_to_vmem [thread:$0]  %s2, 256, %s32, [#allocation7], 128, 128, 8
    $region13: #{tpu_custom_call.1} parent=1 // pred_fallthru
      _
    // Predicated region
    $region14: #{tpu_custom_call.1} parent=1 // pred_check
      _
    $region15: #{tpu_custom_call.1} parent=1 // pred_check_branch
      %39 = sbr.rel (0) target = $region17
    $region16: #{tpu_custom_call.1} parent=1 // pred_region
      %40 = dma.done [#allocation4], 256
    $region17: #{tpu_custom_call.1} parent=1 // pred_fallthru
      _
    // Predicated region
    $region18: #{tpu_custom_call.1} parent=1 // pred_check
      _
    $region19: #{tpu_custom_call.1} parent=1 // pred_check_branch
      %42 = sbr.rel (0) target = $region21
    $region20: #{tpu_custom_call.1} parent=1 // pred_region
      %43 = dma.done [#allocation7], 256
    $region21: #{tpu_custom_call.1} parent=1 // pred_fallthru
      _
    %p44 = scmp.eq.s32.totalorder 0, 0
    // Predicated region
    $region22: #{tpu_custom_call.1} parent=1 // pred_check
      %p45 = pneg %p44
    $region23: #{tpu_custom_call.1} parent=1 // pred_check_branch
      %47 = sbr.rel (%p45) target = $region25
    $region24: #{tpu_custom_call.1} parent=1 // pred_region
      %48 = vst [vmem:[#allocation8] sm:$0xff] 0.0
      %49 = vst [vmem:[#allocation8 + $0x8] sm:$0xff] 0.0
      %50 = vst [vmem:[#allocation8 + $0x10] sm:$0xff] 0.0
      %51 = vst [vmem:[#allocation8 + $0x18] sm:$0xff] 0.0
      %52 = vst [vmem:[#allocation8 + $0x20] sm:$0xff] 0.0
      %53 = vst [vmem:[#allocation8 + $0x28] sm:$0xff] 0.0
    $region25: #{tpu_custom_call.1} parent=1 // pred_fallthru
      _
    %s54 = sld [smem:[#allocation2]]
    %s55 = smul.u32 0, 16
    %s56 = ssub.s32 16, %s55
    %s57 = ssub.s32 %s56, 0
    %p58 = scmp.ge.s32.totalorder %s57, 16
    // Predicated region
    $region26: #{tpu_custom_call.1} parent=1 // pred_check
      %p59 = pneg %p58
    $region27: #{tpu_custom_call.1} parent=1 // pred_check_branch
      %61 = sbr.rel (%p59) target = $region29
    $region28: #{tpu_custom_call.1} parent=1 // pred_region
      %v62 = vld [vmem:[#allocation3] sm:$0xff]
      %v63 = vld [vmem:[#allocation3 + $0x8] sm:$0xff]
      %v64 = vld [vmem:[#allocation6] sm:$0xff]
      %v65 = vld [vmem:[#allocation6 + $0x8] sm:$0xff]
      %v66 = vsub.f32 %v62, %v64
      %v67 = vsub.f32 %v63, %v65
      %v68 = vstv %s54
      %v69 = vsub.f32 %v62, %v68
      %v70 = vsub.f32 %v63, %v68
      %v71 = vld [vmem:[#allocation8] sm:$0xff]
      %v72 = vld [vmem:[#allocation8 + $0x8] sm:$0xff]
      %v73 = vmul.f32 %v66, %v66
      %v74 = vmul.f32 %v67, %v67
      %v75 = vadd.f32 %v73, 0.0
      %v76 = vadd.f32 %v74, 0.0
      %v77 = vadd.f32 %v71, %v75
      %v78 = vadd.f32 %v72, %v76
      %79 = vst [vmem:[#allocation8] sm:$0xff] %v77
      %80 = vst [vmem:[#allocation8 + $0x8] sm:$0xff] %v78
      %s81 = scalar_lea.vmem [#allocation8], 16
      %v82 = vld [vmem:[%s81] sm:$0xff]
      %v83 = vld [vmem:[%s81 + $0x8] sm:$0xff]
      %v84 = vadd.f32 %v69, 0.0
      %v85 = vadd.f32 %v70, 0.0
      %v86 = vadd.f32 %v82, %v84
      %v87 = vadd.f32 %v83, %v85
      %88 = vst [vmem:[%s81] sm:$0xff] %v86
      %89 = vst [vmem:[%s81 + $0x8] sm:$0xff] %v87
      %s90 = scalar_lea.vmem [#allocation8], 32
      %v91 = vld [vmem:[%s90] sm:$0xff]
      %v92 = vld [vmem:[%s90 + $0x8] sm:$0xff]
      %v93 = vmul.f32 %v69, %v69
      %v94 = vmul.f32 %v70, %v70
      %v95 = vadd.f32 %v93, 0.0
      %v96 = vadd.f32 %v94, 0.0
      %v97 = vadd.f32 %v91, %v95
      %v98 = vadd.f32 %v92, %v96
      %99 = vst [vmem:[%s90] sm:$0xff] %v97
      %100 = vst [vmem:[%s90 + $0x8] sm:$0xff] %v98
    $region29: #{tpu_custom_call.1} parent=1 // pred_fallthru
      _
    %p101 = scmp.gt.s32.totalorder %s57, 0
    %p102 = scmp.lt.s32.totalorder %s57, 16
    %p103 = pnand %p101, %p102
    %p104 = pneg %p103
    // Predicated region
    $region30: #{tpu_custom_call.1} parent=1 // pred_check
      _
    $region31: #{tpu_custom_call.1} parent=1 // pred_check_branch
      %106 = sbr.rel (%p103) target = $region33
    $region32: #{tpu_custom_call.1} parent=1 // pred_region
      %v107 = vlaneseq
      %v108 = vshrl.u32 %v107, 7
      %v109 = vadd.s32 %v108, 8
      %v110 = vld [vmem:[#allocation3] sm:$0xff]
      %v111 = vld [vmem:[#allocation3 + $0x8] sm:$0xff]
      %v112 = vld [vmem:[#allocation6] sm:$0xff]
      %v113 = vld [vmem:[#allocation6 + $0x8] sm:$0xff]
      %v114 = vstv %s57
      %vm115 = vcmp.lt.s32.totalorder %v108, %v114
      %vm116 = vcmp.lt.s32.totalorder %v109, %v114
      %v117 = vsub.f32 %v110, %v112
      %v118 = vsub.f32 %v111, %v113
      %v119 = vstv %s54
      %v120 = vsub.f32 %v110, %v119
      %v121 = vsub.f32 %v111, %v119
      %v122 = vsel %vm115, %v117, 0.0
      %v123 = vsel %vm116, %v118, 0.0
      %v124 = vsel %vm115, %v120, 0.0
      %v125 = vsel %vm116, %v121, 0.0
      %v126 = vld [vmem:[#allocation8] sm:$0xff]
      %v127 = vld [vmem:[#allocation8 + $0x8] sm:$0xff]
      %v128 = vmul.f32 %v122, %v122
      %v129 = vmul.f32 %v123, %v123
      %v130 = vadd.f32 %v128, 0.0
      %v131 = vadd.f32 %v129, 0.0
      %v132 = vadd.f32 %v126, %v130
      %v133 = vadd.f32 %v127, %v131
      %134 = vst [vmem:[#allocation8] sm:$0xff] %v132
      %135 = vst [vmem:[#allocation8 + $0x8] sm:$0xff] %v133
      %s136 = scalar_lea.vmem [#allocation8], 16
      %v137 = vld [vmem:[%s136] sm:$0xff]
      %v138 = vld [vmem:[%s136 + $0x8] sm:$0xff]
      %v139 = vadd.f32 %v124, 0.0
      %v140 = vadd.f32 %v125, 0.0
      %v141 = vadd.f32 %v137, %v139
      %v142 = vadd.f32 %v138, %v140
      %143 = vst [vmem:[%s136] sm:$0xff] %v141
      %144 = vst [vmem:[%s136 + $0x8] sm:$0xff] %v142
      %s145 = scalar_lea.vmem [#allocation8], 32
      %v146 = vld [vmem:[%s145] sm:$0xff]
      %v147 = vld [vmem:[%s145 + $0x8] sm:$0xff]
      %v148 = vmul.f32 %v124, %v124
      %v149 = vmul.f32 %v125, %v125
      %v150 = vadd.f32 %v148, 0.0
      %v151 = vadd.f32 %v149, 0.0
      %v152 = vadd.f32 %v146, %v150
      %v153 = vadd.f32 %v147, %v151
      %154 = vst [vmem:[%s145] sm:$0xff] %v152
      %155 = vst [vmem:[%s145 + $0x8] sm:$0xff] %v153
    $region33: #{tpu_custom_call.1} parent=1 // pred_fallthru
      _
    // Predicated region
    $region34: #{tpu_custom_call.1} parent=1 // pred_check
      _
    $region35: #{tpu_custom_call.1} parent=1 // pred_check_branch
      %157 = sbr.rel (0) target = $region37
    $region36: #{tpu_custom_call.1} parent=1 // pred_region
      %s159 = ssub.s32 768, 768
      %160 = vsyncadd [#allocation5], %s159
      %s161 = sshll.u32 [#allocation8], 4
      %s162 = int_to_ptr.vmem [resolvable:$true] %s161
      %167 = dma.vmem_to_hbm [thread:$0]  %s162, 768, %s3, [#allocation5], 128, 128, 8
    $region37: #{tpu_custom_call.1} parent=1 // pred_fallthru
      _
    // Predicated region
    $region38: #{tpu_custom_call.1} parent=1 // pred_check
      _
    $region39: #{tpu_custom_call.1} parent=1 // pred_check_branch
      %169 = sbr.rel (0) target = $region41
    $region40: #{tpu_custom_call.1} parent=1 // pred_region
      %170 = dma.done [#allocation5], 768
    $region41: #{tpu_custom_call.1} parent=1 // pred_fallthru
      _
    %171 = vsyncpa [#allocation4], 1
    %172 = vsyncpa [#allocation7], 1
    %173 = vsyncpa [#allocation5], 1

</llo_original>
